<compile_context>
chip_gen: v7x
topology: tpu7x:2x2x1
jax: 0.10.0
libtpu: 0.0.40
codegen_flags: <defaults>
</compile_context>

<pallas_src>
import functools

import jax
import jax.numpy as jnp
from jax.experimental import pallas as pl
from jax.experimental.pallas import tpu as pltpu


def _block_kernel(xs_ref, w_ref, p_ref, m2_ref, r_ref, rt_ref, a_ref, out_ref, *, c_out):
    eps = 1e-5  # GroupNorm eps (float32)

    xs = xs_ref[...]          # (3*C_in + 1, N)  stacked conv taps + ones row (bias driver)
    w = w_ref[...]            # (C_out, 3*C_in + 1)  pre-standardized weight + bias column

    # ---- conv1d(k=3, stride=1, pad=1) + bias: a single MXU matmul ----
    y = jnp.dot(w, xs, preferred_element_type=jnp.float32)                 # (C_out, N)

    # ---- GroupNorm statistics ----
    # per-(channel, batch) sums of y and y^2 over L, fused into one dot with the
    # constant (N, BT) segment-sum matrix.
    z = jnp.concatenate([y, y * y], axis=0)                                # (2*C_out, N)
    s = jnp.dot(z, r_ref[...], preferred_element_type=jnp.float32)        # (2*C_out, BT)
    # project channel sums to per-group means (block-diag (A^T A)/(Cg*L)) and broadcast
    # them back to channel rows in the same dot.
    stats = jnp.dot(m2_ref[...], s, preferred_element_type=jnp.float32)   # (2*C_out, BT)
    mean = stats[:c_out]                                                   # (C_out, BT)
    var = jnp.maximum(stats[c_out:] - mean * mean, 0.0)                    # E[y^2]-E[y]^2
    # TODO(synk): switch to a two-pass variance if activations ever carry large means.
    rstd = jax.lax.rsqrt(var + eps)

    # ---- GN affine + FiLM folded into one per-(channel, batch) affine ----
    pv = p_ref[...]                                                        # (BT, 2, C_out)
    gamma_eff = jnp.transpose(pv[:, 0, :])                                 # (C_out, BT)
    beta_eff = jnp.transpose(pv[:, 1, :])                                  # (C_out, BT)
    mult = rstd * gamma_eff
    add = beta_eff - mean * mult

    # broadcast (C_out, BT) -> (C_out, N) with one dot against the (BT, N) segment matrix
    ma = jnp.concatenate([mult, add], axis=0)                              # (2*C_out, BT)
    ma_bc = jnp.dot(ma, rt_ref[...], preferred_element_type=jnp.float32)   # (2*C_out, N)
    yn = y * ma_bc[:c_out] + ma_bc[c_out:]

    # ---- PReLU (single shared parameter, scalar from SMEM) ----
    a = a_ref[0]
    out = jnp.maximum(yn, 0.0) + a * jnp.minimum(yn, 0.0)
    out_ref[...] = out.astype(out_ref.dtype)


def block_forward(x, params, scale_shift=None, *, groups=8, batch_tile=None):
    """x: (B, C_in, L) float32.  params: dict of conv/norm/prelu parameters."""
    w, b = params["conv_w"], params["conv_b"]            # (C_out, C_in, 3), (C_out,)
    gamma, beta = params["gn_gamma"], params["gn_beta"]  # (C_out,), (C_out,)
    prelu_a = params["prelu_a"]                          # scalar

    B, C_in, L = x.shape
    C_out = w.shape[0]
    G = groups
    assert C_out % G == 0

    BT = B if batch_tile is None else batch_tile
    assert B % BT == 0
    nbt = B // BT
    NT = BT * L
    if nbt > 1:
        # keep per-step blocks lane-aligned (unmasked vst, valid BlockSpec tiling)
        assert NT % 128 == 0, "batch_tile * L must be a multiple of 128 when tiling"

    f32 = jnp.float32
    x = x.astype(f32)
    w = w.astype(f32)
    eps = 1e-5  # x is float32 -> PyTorch WeightStandardizedConv1d picks 1e-5

    # ---- weight standardization, hoisted out of the kernel (identical for every batch) ----
    w_mean = jnp.mean(w, axis=(1, 2), keepdims=True)
    w_var = jnp.mean((w - w_mean) ** 2, axis=(1, 2), keepdims=True)        # unbiased=False
    wn = (w - w_mean) * jax.lax.rsqrt(w_var + eps)                         # (C_out, C_in, 3)
    w2 = jnp.transpose(wn, (0, 2, 1)).reshape(C_out, 3 * C_in)             # tap-major columns
    w2a = jnp.concatenate([w2, b.reshape(C_out, 1).astype(f32)], axis=1)   # bias as extra K col

    # ---- im2col with the batch folded into lanes: (3*C_in + 1, B*L) ----
    xt = jnp.transpose(x, (1, 0, 2))                                       # (C_in, B, L)
    zc = jnp.zeros((C_in, B, 1), f32)
    tap0 = jnp.concatenate([zc, xt[:, :, :-1]], axis=2)                    # left zero halo / batch
    tap2 = jnp.concatenate([xt[:, :, 1:], zc], axis=2)                     # right zero halo / batch
    xs = jnp.stack([tap0, xt, tap2], axis=0).reshape(3 * C_in, B * L)
    xsa = jnp.concatenate([xs, jnp.ones((1, B * L), f32)], axis=0)         # ones row drives bias

    # ---- fold FiLM into the GroupNorm affine: per-(batch, channel) gamma_eff / beta_eff ----
    gamma = gamma.astype(f32).reshape(1, C_out)
    beta = beta.astype(f32).reshape(1, C_out)
    if scale_shift is None:
        gamma_eff = jnp.broadcast_to(gamma, (B, C_out))
        beta_eff = jnp.broadcast_to(beta, (B, C_out))
    else:
        scale, shift = scale_shift
        scale = scale.astype(f32).reshape(B, C_out)
        shift = shift.astype(f32).reshape(B, C_out)
        gamma_eff = gamma * (scale + 1.0)
        beta_eff = beta * (scale + 1.0) + shift
    p = jnp.stack([gamma_eff, beta_eff], axis=1)                           # (B, 2, C_out)

    # ---- small constant matrices used by the in-kernel GN reductions / broadcasts ----
    cg = C_out // G
    group_onehot = (jnp.arange(C_out)[None, :] // cg == jnp.arange(G)[:, None]).astype(f32)
    m = (group_onehot.T @ group_onehot) / float(cg * L)                    # (C_out, C_out)
    m2 = jnp.kron(jnp.eye(2, dtype=f32), m)                                # (2C, 2C) for [sum; sumsq]
    r = jnp.kron(jnp.eye(BT, dtype=f32), jnp.ones((L, 1), f32))            # (NT, BT) sum over L
    rt = r.T                                                               # (BT, NT) broadcast over L
    a_arr = jnp.asarray(prelu_a, f32).reshape(1)

    kernel = functools.partial(_block_kernel, c_out=C_out)
    out2 = pl.pallas_call(
        kernel,
        out_shape=jax.ShapeDtypeStruct((C_out, B * L), f32),
        grid_spec=pltpu.PrefetchScalarGridSpec(
            num_scalar_prefetch=0,
            grid=(nbt,),
            in_specs=[
                pl.BlockSpec((3 * C_in + 1, NT), lambda i: (0, i)),        # stacked conv input
                pl.BlockSpec((C_out, 3 * C_in + 1), lambda i: (0, 0)),     # standardized weight+bias
                pl.BlockSpec((BT, 2, C_out), lambda i: (i, 0, 0)),         # packed (b,c) affine
                pl.BlockSpec((2 * C_out, 2 * C_out), lambda i: (0, 0)),    # group-mean projector
                pl.BlockSpec((NT, BT), lambda i: (0, 0)),                  # segment-sum matrix
                pl.BlockSpec((BT, NT), lambda i: (0, 0)),                  # segment-broadcast matrix
                pl.BlockSpec(memory_space=pltpu.MemorySpace.SMEM),         # PReLU scalar a
            ],
            out_specs=pl.BlockSpec((C_out, NT), lambda i: (0, i)),
        ),
        compiler_params=pltpu.CompilerParams(
            dimension_semantics=("parallel",),  # batch tiles are independent (fills both v7x TCs)
        ),
    )(xsa, w2a, p, m2, r, rt, a_arr)

    return out2.reshape(C_out, B, L).transpose(1, 0, 2)                    # back to (B, C_out, L)


def block_reference(x, params, scale_shift=None, *, groups=8):
    """Pure-JAX reference mirroring the PyTorch module semantics."""
    eps = 1e-5
    w, b = params["conv_w"], params["conv_b"]
    gamma, beta = params["gn_gamma"], params["gn_beta"]
    a = params["prelu_a"]

    mean = w.mean(axis=(1, 2), keepdims=True)
    var = ((w - mean) ** 2).mean(axis=(1, 2), keepdims=True)
    wn = (w - mean) * jax.lax.rsqrt(var + eps)
    y = jax.lax.conv_general_dilated(
        x, wn, window_strides=(1,), padding=[(1, 1)],
        dimension_numbers=("NCH", "OIH", "NCH")) + b[None, :, None]

    B, C, L = y.shape
    yg = y.reshape(B, groups, C // groups, L)
    m = yg.mean(axis=(2, 3), keepdims=True)
    v = ((yg - m) ** 2).mean(axis=(2, 3), keepdims=True)
    yn = ((yg - m) / jnp.sqrt(v + eps)).reshape(B, C, L)
    yn = yn * gamma[None, :, None] + beta[None, :, None]
    if scale_shift is not None:
        scale, shift = scale_shift
        yn = yn * (scale + 1.0) + shift
    return jnp.maximum(yn, 0.0) + a * jnp.minimum(yn, 0.0)


if __name__ == "__main__":
    # Small shapes consistent with the module: Block(dim=4, dim_out=32, groups=8)
    B, C_in, C_out, L, G = 2, 4, 32, 16, 8

    key = jax.random.PRNGKey(0)
    k_x, k_w, k_b, k_g, k_bt, k_s, k_sh, k_x2 = jax.random.split(key, 8)

    x = jax.random.normal(k_x, (B, C_in, L), jnp.float32)
    params = {
        "conv_w": jax.random.normal(k_w, (C_out, C_in, 3), jnp.float32) * 0.2,
        "conv_b": jax.random.normal(k_b, (C_out,), jnp.float32) * 0.1,
        "gn_gamma": 1.0 + 0.1 * jax.random.normal(k_g, (C_out,), jnp.float32),
        "gn_beta": 0.1 * jax.random.normal(k_bt, (C_out,), jnp.float32),
        "prelu_a": jnp.float32(0.25),  # nn.PReLU() default init
    }
    scale = 0.1 * jax.random.normal(k_s, (B, C_out, 1), jnp.float32)
    shift = 0.1 * jax.random.normal(k_sh, (B, C_out, 1), jnp.float32)
    scale_shift = (scale, shift)

    out = block_forward(x, params, scale_shift, groups=G)
    out = jax.block_until_ready(out)
    ref = block_reference(x, params, scale_shift, groups=G)
    assert out.shape == (B, C_out, L)
    # (FiLM is algebraically folded into the GN affine in the kernel -> tiny FP reassociation)
    assert jnp.allclose(out, ref, atol=1e-3, rtol=1e-3), float(jnp.max(jnp.abs(out - ref)))

    # Also exercise the lane-aligned batch-tiled path (grid=(2,)) and the scale_shift=None case.
    B2, L2 = 4, 64
    x2 = jax.random.normal(k_x2, (B2, C_in, L2), jnp.float32)
    out2 = block_forward(x2, params, None, groups=G, batch_tile=2)
    out2 = jax.block_until_ready(out2)
    ref2 = block_reference(x2, params, None, groups=G)
    assert jnp.allclose(out2, ref2, atol=1e-3, rtol=1e-3), float(jnp.max(jnp.abs(out2 - ref2)))

    print("KERNEL_OK")
</pallas_src>

<mosaic_0001>
module attributes {stable_mosaic.version = 11 : i64} {
  func.func @_block_kernel(%arg0: i32, %arg1: memref<13x32xf32, #tpu.memory_space<vmem>>, %arg2: memref<32x13xf32, #tpu.memory_space<vmem>>, %arg3: memref<2x2x32xf32, #tpu.memory_space<vmem>>, %arg4: memref<64x64xf32, #tpu.memory_space<vmem>>, %arg5: memref<32x2xf32, #tpu.memory_space<vmem>>, %arg6: memref<2x32xf32, #tpu.memory_space<vmem>>, %arg7: memref<1xf32, #tpu.memory_space<smem>>, %arg8: memref<32x32xf32, #tpu.memory_space<vmem>>) attributes {dimension_semantics = [#tpu.dimension_semantics<parallel>], iteration_bounds = array<i64: 1>, scalar_prefetch = 0 : i64, scratch_operands = 0 : i64, tpu.core_type = #tpu.core_type<tc>, window_params = [{transform_indices = @transform_0, window_bounds = array<i64: 13, 32>}, {pipeline_mode = #tpu.pipeline_mode<synchronous>, transform_indices = @transform_1, window_bounds = array<i64: 32, 13>}, {transform_indices = @transform_2, window_bounds = array<i64: 2, 2, 32>}, {pipeline_mode = #tpu.pipeline_mode<synchronous>, transform_indices = @transform_3, window_bounds = array<i64: 64, 64>}, {pipeline_mode = #tpu.pipeline_mode<synchronous>, transform_indices = @transform_4, window_bounds = array<i64: 32, 2>}, {pipeline_mode = #tpu.pipeline_mode<synchronous>, transform_indices = @transform_5, window_bounds = array<i64: 2, 32>}, {transform_indices = @transform_6, window_bounds = array<i64: 1>}, {transform_indices = @transform_7, window_bounds = array<i64: 32, 32>}]} {
    %c0 = arith.constant 0 : index
    %c0_0 = arith.constant 0 : index
    %0 = vector.load %arg1[%c0, %c0_0] : memref<13x32xf32, #tpu.memory_space<vmem>>, vector<13x32xf32>
    %c0_1 = arith.constant 0 : index
    %c0_2 = arith.constant 0 : index
    %1 = vector.load %arg2[%c0_1, %c0_2] : memref<32x13xf32, #tpu.memory_space<vmem>>, vector<32x13xf32>
    %cst = arith.constant dense<0.000000e+00> : vector<32x32xf32>
    %2 = tpu.matmul %1, %0, %cst {dimension_numbers = #tpu.dot_dimension_numbers<[1], [0], [0], [1], [0, 0, 1, 1], [], []>} : vector<32x13xf32>, vector<13x32xf32>, vector<32x32xf32> -> vector<32x32xf32>
    %3 = arith.mulf %2, %2 : vector<32x32xf32>
    %4 = tpu.concatenate %2, %3 in 0 : vector<32x32xf32>, vector<32x32xf32> -> vector<64x32xf32>
    %c0_3 = arith.constant 0 : index
    %c0_4 = arith.constant 0 : index
    %5 = vector.load %arg5[%c0_3, %c0_4] : memref<32x2xf32, #tpu.memory_space<vmem>>, vector<32x2xf32>
    %cst_5 = arith.constant dense<0.000000e+00> : vector<64x2xf32>
    %6 = tpu.matmul %4, %5, %cst_5 {dimension_numbers = #tpu.dot_dimension_numbers<[1], [0], [0], [1], [0, 0, 1, 1], [], []>} : vector<64x32xf32>, vector<32x2xf32>, vector<64x2xf32> -> vector<64x2xf32>
    %c0_6 = arith.constant 0 : index
    %c0_7 = arith.constant 0 : index
    %7 = vector.load %arg4[%c0_6, %c0_7] : memref<64x64xf32, #tpu.memory_space<vmem>>, vector<64x64xf32>
    %cst_8 = arith.constant dense<0.000000e+00> : vector<64x2xf32>
    %8 = tpu.matmul %7, %6, %cst_8 {dimension_numbers = #tpu.dot_dimension_numbers<[1], [0], [0], [1], [0, 0, 1, 1], [], []>} : vector<64x64xf32>, vector<64x2xf32>, vector<64x2xf32> -> vector<64x2xf32>
    %9 = vector.extract_strided_slice %8 {offsets = [0, 0], sizes = [32, 2], strides = [1, 1]} : vector<64x2xf32> to vector<32x2xf32>
    %10 = vector.extract_strided_slice %8 {offsets = [32, 0], sizes = [32, 2], strides = [1, 1]} : vector<64x2xf32> to vector<32x2xf32>
    %11 = arith.mulf %9, %9 : vector<32x2xf32>
    %12 = arith.subf %10, %11 : vector<32x2xf32>
    %cst_9 = arith.constant 0.000000e+00 : f32
    %13 = vector.broadcast %cst_9 : f32 to vector<32x2xf32>
    %14 = arith.maximumf %12, %13 : vector<32x2xf32>
    %cst_10 = arith.constant 9.99999974E-6 : f32
    %15 = vector.broadcast %cst_10 : f32 to vector<32x2xf32>
    %16 = arith.addf %14, %15 : vector<32x2xf32>
    %17 = math.rsqrt %16 : vector<32x2xf32>
    %c0_11 = arith.constant 0 : index
    %c0_12 = arith.constant 0 : index
    %c0_13 = arith.constant 0 : index
    %18 = vector.load %arg3[%c0_11, %c0_12, %c0_13] : memref<2x2x32xf32, #tpu.memory_space<vmem>>, vector<2x2x32xf32>
    %19 = vector.extract_strided_slice %18 {offsets = [0, 0, 0], sizes = [2, 1, 32], strides = [1, 1, 1]} : vector<2x2x32xf32> to vector<2x1x32xf32>
    %20 = vector.shape_cast %19 : vector<2x1x32xf32> to vector<2x32xf32>
    %21 = tpu.transpose %20, [1, 0] : vector<2x32xf32> -> vector<32x2xf32>
    %22 = vector.extract_strided_slice %18 {offsets = [0, 1, 0], sizes = [2, 1, 32], strides = [1, 1, 1]} : vector<2x2x32xf32> to vector<2x1x32xf32>
    %23 = vector.shape_cast %22 : vector<2x1x32xf32> to vector<2x32xf32>
    %24 = tpu.transpose %23, [1, 0] : vector<2x32xf32> -> vector<32x2xf32>
    %25 = arith.mulf %17, %21 : vector<32x2xf32>
    %26 = arith.mulf %9, %25 : vector<32x2xf32>
    %27 = arith.subf %24, %26 : vector<32x2xf32>
    %28 = tpu.concatenate %25, %27 in 0 : vector<32x2xf32>, vector<32x2xf32> -> vector<64x2xf32>
    %c0_14 = arith.constant 0 : index
    %c0_15 = arith.constant 0 : index
    %29 = vector.load %arg6[%c0_14, %c0_15] : memref<2x32xf32, #tpu.memory_space<vmem>>, vector<2x32xf32>
    %cst_16 = arith.constant dense<0.000000e+00> : vector<64x32xf32>
    %30 = tpu.matmul %28, %29, %cst_16 {dimension_numbers = #tpu.dot_dimension_numbers<[1], [0], [0], [1], [0, 0, 1, 1], [], []>} : vector<64x2xf32>, vector<2x32xf32>, vector<64x32xf32> -> vector<64x32xf32>
    %31 = vector.extract_strided_slice %30 {offsets = [0, 0], sizes = [32, 32], strides = [1, 1]} : vector<64x32xf32> to vector<32x32xf32>
    %32 = arith.mulf %2, %31 : vector<32x32xf32>
    %33 = vector.extract_strided_slice %30 {offsets = [32, 0], sizes = [32, 32], strides = [1, 1]} : vector<64x32xf32> to vector<32x32xf32>
    %34 = arith.addf %32, %33 : vector<32x32xf32>
    %c0_17 = arith.constant 0 : index
    %35 = memref.load %arg7[%c0_17] : memref<1xf32, #tpu.memory_space<smem>>
    %cst_18 = arith.constant 0.000000e+00 : f32
    %36 = vector.broadcast %cst_18 : f32 to vector<32x32xf32>
    %37 = arith.maximumf %34, %36 : vector<32x32xf32>
    %cst_19 = arith.constant 0.000000e+00 : f32
    %38 = vector.broadcast %cst_19 : f32 to vector<32x32xf32>
    %39 = arith.minimumf %34, %38 : vector<32x32xf32>
    %40 = vector.broadcast %35 : f32 to vector<32x32xf32>
    %41 = arith.mulf %40, %39 : vector<32x32xf32>
    %42 = arith.addf %37, %41 : vector<32x32xf32>
    %c0_20 = arith.constant 0 : index
    %c0_21 = arith.constant 0 : index
    %43 = vector.load %arg8[%c0_20, %c0_21] : memref<32x32xf32, #tpu.memory_space<vmem>>, vector<32x32xf32>
    tpu.vector_store %arg8[%c0_20, %c0_21], %42 {strides = array<i32>} : memref<32x32xf32, #tpu.memory_space<vmem>>, vector<32x32xf32>,
    return
  }
  func.func @transform_0(%arg0: i32) -> (i32, i32) {
    %c0_i32 = arith.constant 0 : i32
    %c0_i32_0 = arith.constant 0 : i32
    return %c0_i32, %arg0 : i32, i32
  }
  func.func @transform_1(%arg0: i32) -> (i32, i32) {
    %c0_i32 = arith.constant 0 : i32
    %c0_i32_0 = arith.constant 0 : i32
    %c0_i32_1 = arith.constant 0 : i32
    return %c0_i32, %c0_i32_0 : i32, i32
  }
  func.func @transform_2(%arg0: i32) -> (i32, i32, i32) {
    %c0_i32 = arith.constant 0 : i32
    %c0_i32_0 = arith.constant 0 : i32
    %c0_i32_1 = arith.constant 0 : i32
    return %arg0, %c0_i32, %c0_i32_0 : i32, i32, i32
  }
  func.func @transform_3(%arg0: i32) -> (i32, i32) {
    %c0_i32 = arith.constant 0 : i32
    %c0_i32_0 = arith.constant 0 : i32
    %c0_i32_1 = arith.constant 0 : i32
    return %c0_i32, %c0_i32_0 : i32, i32
  }
  func.func @transform_4(%arg0: i32) -> (i32, i32) {
    %c0_i32 = arith.constant 0 : i32
    %c0_i32_0 = arith.constant 0 : i32
    %c0_i32_1 = arith.constant 0 : i32
    return %c0_i32, %c0_i32_0 : i32, i32
  }
  func.func @transform_5(%arg0: i32) -> (i32, i32) {
    %c0_i32 = arith.constant 0 : i32
    %c0_i32_0 = arith.constant 0 : i32
    %c0_i32_1 = arith.constant 0 : i32
    return %c0_i32, %c0_i32_0 : i32, i32
  }
  func.func @transform_6(%arg0: i32) -> i32 {
    %c0_i32 = arith.constant 0 : i32
    %c0_i32_0 = arith.constant 0 : i32
    return %c0_i32 : i32
  }
  func.func @transform_7(%arg0: i32) -> (i32, i32) {
    %c0_i32 = arith.constant 0 : i32
    %c0_i32_0 = arith.constant 0 : i32
    return %c0_i32, %arg0 : i32, i32
  }
}

</mosaic_0001>

<llo_original>
// kernel: tpu_custom_call.1
$region0: #{tpu_custom_call.1}
  #allocation0 [shape = 'u32[]', space=smem, size = 0x4, offset = 0x4, fixed_abs, tag = 'smem constant byte address 0x4 - core index']
  #allocation1 [shape = 'u32[144,128]{1,0:T(1,128)}', space=vmem, size = 0x12000, scoped, tag = 'internal scratch']
  #allocation2 [shape = 'f32[1]{0:T(128)S(6)}', space=smem, size = 0x200, scoped, tag = 'scoped memory for tpu_custom_call.1']
  %s0 = inlined_call_operand.vmem [shape: f32[13,32], index: 0, kind: input, shape index: {}]
  %s1 = inlined_call_operand.vmem [shape: f32[32,13], index: 1, kind: input, shape index: {}]
  %s2 = inlined_call_operand.vmem [shape: f32[2,2,32], index: 2, kind: input, shape index: {}]
  %s3 = inlined_call_operand.vmem [shape: f32[64,64], index: 3, kind: input, shape index: {}]
  %s4 = inlined_call_operand.vmem [shape: f32[32,2], index: 4, kind: input, shape index: {}]
  %s5 = inlined_call_operand.vmem [shape: f32[2,32], index: 5, kind: input, shape index: {}]
  %s6 = inlined_call_operand.<no memory space> [shape: f32[1], index: 6, kind: input, shape index: {}]
  %s7 = inlined_call_operand.hbm [shape: f32[32,32], index: 7, kind: output, shape index: {}]
  %s8 = sld [smem:[#allocation0]]
  $region38: #{tpu_custom_call.1} parent=0
    _
  %s10 = ssub.s32 1, %s8
  %s11 = scalar_select 0, %s10, %s8
  %12 = sst [smem:[#allocation2]] %s6
  $region1: #{tpu_custom_call.1} parent=0
    #allocation3 [shape = 'u8[16384]{0}', space=vmem, size = 0x4000, scoped, tag = 'output window, operand 0, single buffered']
    #allocation4 [shape = 's32[1]{0}', space=sflag, size = 0x4, scoped, tag = 'scoped memory for tpu_custom_call.1']
    %13 = vsyncpa [#allocation4], 0
    // Predicated region
    $region2: #{tpu_custom_call.1} parent=1 // pred_check
      _
    $region3: #{tpu_custom_call.1} parent=1 // pred_check_branch
      %15 = sbr.rel (0) target = $region5
    $region4: #{tpu_custom_call.1} parent=1 // pred_region
      _
    $region5: #{tpu_custom_call.1} parent=1 // pred_fallthru
      _
    // Predicated region
    $region6: #{tpu_custom_call.1} parent=1 // pred_check
      _
    $region7: #{tpu_custom_call.1} parent=1 // pred_check_branch
      %17 = sbr.rel (0) target = $region9
    $region8: #{tpu_custom_call.1} parent=1 // pred_region
      _
    $region9: #{tpu_custom_call.1} parent=1 // pred_fallthru
      _
    // Predicated region
    $region10: #{tpu_custom_call.1} parent=1 // pred_check
      _
    $region11: #{tpu_custom_call.1} parent=1 // pred_check_branch
      %19 = sbr.rel (0) target = $region13
    $region12: #{tpu_custom_call.1} parent=1 // pred_region
      _
    $region13: #{tpu_custom_call.1} parent=1 // pred_fallthru
      _
    // Predicated region
    $region14: #{tpu_custom_call.1} parent=1 // pred_check
      _
    $region15: #{tpu_custom_call.1} parent=1 // pred_check_branch
      %21 = sbr.rel (0) target = $region17
    $region16: #{tpu_custom_call.1} parent=1 // pred_region
      _
    $region17: #{tpu_custom_call.1} parent=1 // pred_fallthru
      _
    // Predicated region
    $region18: #{tpu_custom_call.1} parent=1 // pred_check
      _
    $region19: #{tpu_custom_call.1} parent=1 // pred_check_branch
      %23 = sbr.rel (0) target = $region21
    $region20: #{tpu_custom_call.1} parent=1 // pred_region
      _
    $region21: #{tpu_custom_call.1} parent=1 // pred_fallthru
      _
    // Predicated region
    $region22: #{tpu_custom_call.1} parent=1 // pred_check
      _
    $region23: #{tpu_custom_call.1} parent=1 // pred_check_branch
      %25 = sbr.rel (0) target = $region25
    $region24: #{tpu_custom_call.1} parent=1 // pred_region
      _
    $region25: #{tpu_custom_call.1} parent=1 // pred_fallthru
      _
    // Predicated region
    $region26: #{tpu_custom_call.1} parent=1 // pred_check
      _
    $region27: #{tpu_custom_call.1} parent=1 // pred_check_branch
      %27 = sbr.rel (0) target = $region29
    $region28: #{tpu_custom_call.1} parent=1 // pred_region
      _
    $region29: #{tpu_custom_call.1} parent=1 // pred_fallthru
      _
    %v28 = vld [vmem:[%s0] sm:$0xff]
    %v29 = vld [vmem:[%s0 + $0x8] sm:$0x1f]
    %v30 = vld [vmem:[%s1] sm:$0xff]
    %v31 = vld [vmem:[%s1 + $0x8] sm:$0xff]
    %v32 = vld [vmem:[%s1 + $0x10] sm:$0xff]
    %v33 = vld [vmem:[%s1 + $0x18] sm:$0xff]
    %vm34 = vcmask 105472
    %v36 = vsel %vm34, %v30, 0
    %v39 = vsel %vm34, %v31, 0
    %v42 = vsel %vm34, %v32, 0
    %v45 = vsel %vm34, %v33, 0
    %vm47 = vcmask 1044480
    %v49 = vsel %vm47, %v29, 0
    %51 = vmatprep.subr.mxu0 0.0
    %52 = vmatpush1.msra.mxu0 %v28
    %53 = vmatprep.subr.mxu0 0.0
    %54 = vmatpush1.msra.mxu0 %v49
    %55 = vmatprep.subr.mxu0 0.0
    %56 = vmatpush1.msra.mxu0 0.0
    %57 = vmatprep.subr.mxu0 0.0
    %58 = vmatpush1.msra.mxu0 0.0
    %59 = vmatprep.subr.mxu0 0.0
    %60 = vmatpush1.msra.mxu0 0.0
    %61 = vmatprep.subr.mxu0 0.0
    %62 = vmatpush1.msra.mxu0 0.0
    %63 = vmatprep.subr.mxu0 0.0
    %64 = vmatpush1.msra.mxu0 0.0
    %65 = vmatprep.subr.mxu0 0.0
    %66 = vmatpush1.msra.mxu0 0.0
    %67 = vmatprep.subr.mxu0 0.0
    %68 = vmatpush1.msra.mxu0 0.0
    %69 = vmatprep.subr.mxu0 0.0
    %70 = vmatpush1.msra.mxu0 0.0
    %71 = vmatprep.subr.mxu0 0.0
    %72 = vmatpush1.msra.mxu0 0.0
    %73 = vmatprep.subr.mxu0 0.0
    %74 = vmatpush1.msra.mxu0 0.0
    %75 = vmatprep.subr.mxu0 0.0
    %76 = vmatpush1.msra.mxu0 0.0
    %77 = vmatprep.subr.mxu0 0.0
    %78 = vmatpush1.msra.mxu0 0.0
    %79 = vmatprep.subr.mxu0 0.0
    %80 = vmatpush1.msra.mxu0 0.0
    %81 = vmatprep.subr.mxu0 0.0
    %82 = vmatpush1.msra.mxu0 0.0
    %83 = vmatprep.subr.mxu0 0.0
    %84 = vmatpush1.msra.mxu0 0.0
    %85 = vmatprep.subr.mxu0 0.0
    %86 = vmatpush1.msra.mxu0 0.0
    %87 = vmatprep.subr.mxu0 0.0
    %88 = vmatpush1.msra.mxu0 0.0
    %89 = vmatprep.subr.mxu0 0.0
    %90 = vmatpush1.msra.mxu0 0.0
    %91 = vmatprep.subr.mxu0 0.0
    %92 = vmatpush1.msra.mxu0 0.0
    %93 = vmatprep.subr.mxu0 0.0
    %94 = vmatpush1.msra.mxu0 0.0
    %95 = vmatprep.subr.mxu0 0.0
    %96 = vmatpush1.msra.mxu0 0.0
    %97 = vmatprep.subr.mxu0 0.0
    %98 = vmatpush1.msra.mxu0 0.0
    %99 = vmatprep.subr.mxu0 0.0
    %100 = vmatpush1.msra.mxu0 0.0
    %101 = vmatprep.subr.mxu0 0.0
    %102 = vmatpush1.msra.mxu0 0.0
    %103 = vmatprep.subr.mxu0 0.0
    %104 = vmatpush1.msra.mxu0 0.0
    %105 = vmatprep.subr.mxu0 0.0
    %106 = vmatpush1.msra.mxu0 0.0
    %107 = vmatprep.subr.mxu0 0.0
    %108 = vmatpush1.msra.mxu0 0.0
    %109 = vmatprep.subr.mxu0 0.0
    %110 = vmatpush1.msra.mxu0 0.0
    %111 = vmatprep.subr.mxu0 0.0
    %112 = vmatpush1.msra.mxu0 0.0
    %113 = vmatprep.subr.mxu0 0.0
    %114 = vmatpush1.msra.mxu0 0.0
    %115 = vmatprep.mubr.f32.mxu0 0.0
    %116 = vmatmul.mubr.f32.gmra.mrb[0].mxu0 %v36
    %v117 = vpop.f32.mrb[0].mxu0
    %v118 = vadd.f32 0.0, %v117
    %v119 = vpop.f32.mrb[0].mxu0
    %120 = vmatprep.mubr.f32.mxu0 0.0
    %121 = vmatmul.mubr.f32.gmra.mrb[0].mxu0 %v39
    %v122 = vpop.f32.mrb[0].mxu0
    %v123 = vadd.f32 0.0, %v122
    %v124 = vpop.f32.mrb[0].mxu0
    %125 = vmatprep.mubr.f32.mxu0 0.0
    %126 = vmatmul.mubr.f32.gmra.mrb[0].mxu0 %v42
    %v127 = vpop.f32.mrb[0].mxu0
    %v128 = vadd.f32 0.0, %v127
    %v129 = vpop.f32.mrb[0].mxu0
    %130 = vmatprep.mubr.f32.mxu0 0.0
    %131 = vmatmul.mubr.f32.gmra.mrb[0].mxu0 %v45
    %v132 = vpop.f32.mrb[0].mxu0
    %v133 = vadd.f32 0.0, %v132
    %v134 = vpop.f32.mrb[0].mxu0
    %135 = vdwg.mxu0
    %v136 = vmul.f32 %v118, %v118
    %v137 = vmul.f32 %v123, %v123
    %v138 = vmul.f32 %v128, %v128
    %v139 = vmul.f32 %v133, %v133
    %v140 = vld [vmem:[%s4] sm:$0xff]
    %v141 = vld [vmem:[%s4 + $0x8] sm:$0xff]
    %v142 = vld [vmem:[%s4 + $0x10] sm:$0xff]
    %v143 = vld [vmem:[%s4 + $0x18] sm:$0xff]
    %vm144 = vcmask 261120
    %v146 = vsel %vm144, %v118, 0
    %v149 = vsel %vm144, %v123, 0
    %v152 = vsel %vm144, %v128, 0
    %v155 = vsel %vm144, %v133, 0
    %v158 = vsel %vm144, %v136, 0
    %v161 = vsel %vm144, %v137, 0
    %v164 = vsel %vm144, %v138, 0
    %v167 = vsel %vm144, %v139, 0
    %169 = vmatprep.subr.mxu0 0.0
    %170 = vmatpush1.msra.mxu0 %v140
    %171 = vmatprep.subr.mxu0 0.0
    %172 = vmatpush1.msra.mxu0 %v141
    %173 = vmatprep.subr.mxu0 0.0
    %174 = vmatpush1.msra.mxu0 %v142
    %175 = vmatprep.subr.mxu0 0.0
    %176 = vmatpush1.msra.mxu0 %v143
    %177 = vmatprep.subr.mxu0 0.0
    %178 = vmatpush1.msra.mxu0 0.0
    %179 = vmatprep.subr.mxu0 0.0
    %180 = vmatpush1.msra.mxu0 0.0
    %181 = vmatprep.subr.mxu0 0.0
    %182 = vmatpush1.msra.mxu0 0.0
    %183 = vmatprep.subr.mxu0 0.0
    %184 = vmatpush1.msra.mxu0 0.0
    %185 = vmatprep.subr.mxu0 0.0
    %186 = vmatpush1.msra.mxu0 0.0
    %187 = vmatprep.subr.mxu0 0.0
    %188 = vmatpush1.msra.mxu0 0.0
    %189 = vmatprep.subr.mxu0 0.0
    %190 = vmatpush1.msra.mxu0 0.0
    %191 = vmatprep.subr.mxu0 0.0
    %192 = vmatpush1.msra.mxu0 0.0
    %193 = vmatprep.subr.mxu0 0.0
    %194 = vmatpush1.msra.mxu0 0.0
    %195 = vmatprep.subr.mxu0 0.0
    %196 = vmatpush1.msra.mxu0 0.0
    %197 = vmatprep.subr.mxu0 0.0
    %198 = vmatpush1.msra.mxu0 0.0
    %199 = vmatprep.subr.mxu0 0.0
    %200 = vmatpush1.msra.mxu0 0.0
    %201 = vmatprep.subr.mxu0 0.0
    %202 = vmatpush1.msra.mxu0 0.0
    %203 = vmatprep.subr.mxu0 0.0
    %204 = vmatpush1.msra.mxu0 0.0
    %205 = vmatprep.subr.mxu0 0.0
    %206 = vmatpush1.msra.mxu0 0.0
    %207 = vmatprep.subr.mxu0 0.0
    %208 = vmatpush1.msra.mxu0 0.0
    %209 = vmatprep.subr.mxu0 0.0
    %210 = vmatpush1.msra.mxu0 0.0
    %211 = vmatprep.subr.mxu0 0.0
    %212 = vmatpush1.msra.mxu0 0.0
    %213 = vmatprep.subr.mxu0 0.0
    %214 = vmatpush1.msra.mxu0 0.0
    %215 = vmatprep.subr.mxu0 0.0
    %216 = vmatpush1.msra.mxu0 0.0
    %217 = vmatprep.subr.mxu0 0.0
    %218 = vmatpush1.msra.mxu0 0.0
    %219 = vmatprep.subr.mxu0 0.0
    %220 = vmatpush1.msra.mxu0 0.0
    %221 = vmatprep.subr.mxu0 0.0
    %222 = vmatpush1.msra.mxu0 0.0
    %223 = vmatprep.subr.mxu0 0.0
    %224 = vmatpush1.msra.mxu0 0.0
    %225 = vmatprep.subr.mxu0 0.0
    %226 = vmatpush1.msra.mxu0 0.0
    %227 = vmatprep.subr.mxu0 0.0
    %228 = vmatpush1.msra.mxu0 0.0
    %229 = vmatprep.subr.mxu0 0.0
    %230 = vmatpush1.msra.mxu0 0.0
    %231 = vmatprep.subr.mxu0 0.0
    %232 = vmatpush1.msra.mxu0 0.0
    %233 = vmatprep.mubr.f32.mxu0 0.0
    %234 = vmatmul.mubr.f32.gmra.mrb[0].mxu0 %v146
    %v235 = vpop.f32.mrb[0].mxu0
    %v236 = vadd.f32 0.0, %v235
    %v237 = vpop.f32.mrb[0].mxu0
    %238 = vmatprep.mubr.f32.mxu0 0.0
    %239 = vmatmul.mubr.f32.gmra.mrb[0].mxu0 %v149
    %v240 = vpop.f32.mrb[0].mxu0
    %v241 = vadd.f32 0.0, %v240
    %v242 = vpop.f32.mrb[0].mxu0
    %243 = vmatprep.mubr.f32.mxu0 0.0
    %244 = vmatmul.mubr.f32.gmra.mrb[0].mxu0 %v152
    %v245 = vpop.f32.mrb[0].mxu0
    %v246 = vadd.f32 0.0, %v245
    %v247 = vpop.f32.mrb[0].mxu0
    %248 = vmatprep.mubr.f32.mxu0 0.0
    %249 = vmatmul.mubr.f32.gmra.mrb[0].mxu0 %v155
    %v250 = vpop.f32.mrb[0].mxu0
    %v251 = vadd.f32 0.0, %v250
    %v252 = vpop.f32.mrb[0].mxu0
    %253 = vmatprep.mubr.f32.mxu0 0.0
    %254 = vmatmul.mubr.f32.gmra.mrb[0].mxu0 %v158
    %v255 = vpop.f32.mrb[0].mxu0
    %v256 = vadd.f32 0.0, %v255
    %v257 = vpop.f32.mrb[0].mxu0
    %258 = vmatprep.mubr.f32.mxu0 0.0
    %259 = vmatmul.mubr.f32.gmra.mrb[0].mxu0 %v161
    %v260 = vpop.f32.mrb[0].mxu0
    %v261 = vadd.f32 0.0, %v260
    %v262 = vpop.f32.mrb[0].mxu0
    %263 = vmatprep.mubr.f32.mxu0 0.0
    %264 = vmatmul.mubr.f32.gmra.mrb[0].mxu0 %v164
    %v265 = vpop.f32.mrb[0].mxu0
    %v266 = vadd.f32 0.0, %v265
    %v267 = vpop.f32.mrb[0].mxu0
    %268 = vmatprep.mubr.f32.mxu0 0.0
    %269 = vmatmul.mubr.f32.gmra.mrb[0].mxu0 %v167
    %v270 = vpop.f32.mrb[0].mxu0
    %v271 = vadd.f32 0.0, %v270
    %v272 = vpop.f32.mrb[0].mxu0
    %273 = vdwg.mxu0
    %v274 = vld [vmem:[%s3] sm:$0xff]
    %v275 = vld [vmem:[%s3 + $0x8] sm:$0xff]
    %v276 = vld [vmem:[%s3 + $0x10] sm:$0xff]
    %v277 = vld [vmem:[%s3 + $0x18] sm:$0xff]
    %v278 = vld [vmem:[%s3 + $0x20] sm:$0xff]
    %v279 = vld [vmem:[%s3 + $0x28] sm:$0xff]
    %v280 = vld [vmem:[%s3 + $0x30] sm:$0xff]
    %v281 = vld [vmem:[%s3 + $0x38] sm:$0xff]
    %vm282 = vcmask 523264
    %v284 = vsel %vm282, %v274, 0
    %v287 = vsel %vm282, %v275, 0
    %v290 = vsel %vm282, %v276, 0
    %v293 = vsel %vm282, %v277, 0
    %v296 = vsel %vm282, %v278, 0
    %v299 = vsel %vm282, %v279, 0
    %v302 = vsel %vm282, %v280, 0
    %v305 = vsel %vm282, %v281, 0
    %307 = vmatprep.subr.mxu0 0.0
    %308 = vmatpush1.msra.mxu0 %v236
    %309 = vmatprep.subr.mxu0 0.0
    %310 = vmatpush1.msra.mxu0 %v241
    %311 = vmatprep.subr.mxu0 0.0
    %312 = vmatpush1.msra.mxu0 %v246
    %313 = vmatprep.subr.mxu0 0.0
    %314 = vmatpush1.msra.mxu0 %v251
    %315 = vmatprep.subr.mxu0 0.0
    %316 = vmatpush1.msra.mxu0 %v256
    %317 = vmatprep.subr.mxu0 0.0
    %318 = vmatpush1.msra.mxu0 %v261
    %319 = vmatprep.subr.mxu0 0.0
    %320 = vmatpush1.msra.mxu0 %v266
    %321 = vmatprep.subr.mxu0 0.0
    %322 = vmatpush1.msra.mxu0 %v271
    %323 = vmatprep.subr.mxu0 0.0
    %324 = vmatpush1.msra.mxu0 0.0
    %325 = vmatprep.subr.mxu0 0.0
    %326 = vmatpush1.msra.mxu0 0.0
    %327 = vmatprep.subr.mxu0 0.0
    %328 = vmatpush1.msra.mxu0 0.0
    %329 = vmatprep.subr.mxu0 0.0
    %330 = vmatpush1.msra.mxu0 0.0
    %331 = vmatprep.subr.mxu0 0.0
    %332 = vmatpush1.msra.mxu0 0.0
    %333 = vmatprep.subr.mxu0 0.0
    %334 = vmatpush1.msra.mxu0 0.0
    %335 = vmatprep.subr.mxu0 0.0
    %336 = vmatpush1.msra.mxu0 0.0
    %337 = vmatprep.subr.mxu0 0.0
    %338 = vmatpush1.msra.mxu0 0.0
    %339 = vmatprep.subr.mxu0 0.0
    %340 = vmatpush1.msra.mxu0 0.0
    %341 = vmatprep.subr.mxu0 0.0
    %342 = vmatpush1.msra.mxu0 0.0
    %343 = vmatprep.subr.mxu0 0.0
    %344 = vmatpush1.msra.mxu0 0.0
    %345 = vmatprep.subr.mxu0 0.0
    %346 = vmatpush1.msra.mxu0 0.0
    %347 = vmatprep.subr.mxu0 0.0
    %348 = vmatpush1.msra.mxu0 0.0
    %349 = vmatprep.subr.mxu0 0.0
    %350 = vmatpush1.msra.mxu0 0.0
    %351 = vmatprep.subr.mxu0 0.0
    %352 = vmatpush1.msra.mxu0 0.0
    %353 = vmatprep.subr.mxu0 0.0
    %354 = vmatpush1.msra.mxu0 0.0
    %355 = vmatprep.subr.mxu0 0.0
    %356 = vmatpush1.msra.mxu0 0.0
    %357 = vmatprep.subr.mxu0 0.0
    %358 = vmatpush1.msra.mxu0 0.0
    %359 = vmatprep.subr.mxu0 0.0
    %360 = vmatpush1.msra.mxu0 0.0
    %361 = vmatprep.subr.mxu0 0.0
    %362 = vmatpush1.msra.mxu0 0.0
    %363 = vmatprep.subr.mxu0 0.0
    %364 = vmatpush1.msra.mxu0 0.0
    %365 = vmatprep.subr.mxu0 0.0
    %366 = vmatpush1.msra.mxu0 0.0
    %367 = vmatprep.subr.mxu0 0.0
    %368 = vmatpush1.msra.mxu0 0.0
    %369 = vmatprep.subr.mxu0 0.0
    %370 = vmatpush1.msra.mxu0 0.0
    %371 = vmatprep.mubr.f32.mxu0 0.0
    %372 = vmatmul.mubr.f32.gmra.mrb[0].mxu0 %v284
    %v373 = vpop.f32.mrb[0].mxu0
    %v374 = vadd.f32 0.0, %v373
    %v375 = vpop.f32.mrb[0].mxu0
    %376 = vmatprep.mubr.f32.mxu0 0.0
    %377 = vmatmul.mubr.f32.gmra.mrb[0].mxu0 %v287
    %v378 = vpop.f32.mrb[0].mxu0
    %v379 = vadd.f32 0.0, %v378
    %v380 = vpop.f32.mrb[0].mxu0
    %381 = vmatprep.mubr.f32.mxu0 0.0
    %382 = vmatmul.mubr.f32.gmra.mrb[0].mxu0 %v290
    %v383 = vpop.f32.mrb[0].mxu0
    %v384 = vadd.f32 0.0, %v383
    %v385 = vpop.f32.mrb[0].mxu0
    %386 = vmatprep.mubr.f32.mxu0 0.0
    %387 = vmatmul.mubr.f32.gmra.mrb[0].mxu0 %v293
    %v388 = vpop.f32.mrb[0].mxu0
    %v389 = vadd.f32 0.0, %v388
    %v390 = vpop.f32.mrb[0].mxu0
    %391 = vmatprep.mubr.f32.mxu0 0.0
    %392 = vmatmul.mubr.f32.gmra.mrb[0].mxu0 %v296
    %v393 = vpop.f32.mrb[0].mxu0
    %v394 = vadd.f32 0.0, %v393
    %v395 = vpop.f32.mrb[0].mxu0
    %396 = vmatprep.mubr.f32.mxu0 0.0
    %397 = vmatmul.mubr.f32.gmra.mrb[0].mxu0 %v299
    %v398 = vpop.f32.mrb[0].mxu0
    %v399 = vadd.f32 0.0, %v398
    %v400 = vpop.f32.mrb[0].mxu0
    %401 = vmatprep.mubr.f32.mxu0 0.0
    %402 = vmatmul.mubr.f32.gmra.mrb[0].mxu0 %v302
    %v403 = vpop.f32.mrb[0].mxu0
    %v404 = vadd.f32 0.0, %v403
    %v405 = vpop.f32.mrb[0].mxu0
    %406 = vmatprep.mubr.f32.mxu0 0.0
    %407 = vmatmul.mubr.f32.gmra.mrb[0].mxu0 %v305
    %v408 = vpop.f32.mrb[0].mxu0
    %v409 = vadd.f32 0.0, %v408
    %v410 = vpop.f32.mrb[0].mxu0
    %411 = vdwg.mxu0
    %v412 = vmul.f32 %v374, %v374
    %v413 = vmul.f32 %v379, %v379
    %v414 = vmul.f32 %v384, %v384
    %v415 = vmul.f32 %v389, %v389
    %v416 = vsub.f32 %v394, %v412
    %v417 = vsub.f32 %v399, %v413
    %v418 = vsub.f32 %v404, %v414
    %v419 = vsub.f32 %v409, %v415
    %v420 = vmax.f32 %v416, 0.0
    %v421 = vmax.f32 %v417, 0.0
    %v422 = vmax.f32 %v418, 0.0
    %v423 = vmax.f32 %v419, 0.0
    %v424 = vadd.f32 %v420, 1e-05
    %v425 = vadd.f32 %v421, 1e-05
    %v426 = vadd.f32 %v422, 1e-05
    %v427 = vadd.f32 %v423, 1e-05
    %v428 = vrsqrt.pop %v424
    %v429 = vrsqrt.pop %v425
    %v430 = vrsqrt.pop %v426
    %v431 = vrsqrt.pop %v427
    %v432 = vld [vmem:[%s2] sm:$0x3]
    %v433 = vld [vmem:[%s2 + $0x2] sm:$0x3]
    %v436 = vrot.slane %v433, 7
    %vm437 = vcmask 1041409
    %v438 = vsel %vm437, %v436, %v432
    %440 = vxpose.xlu0.b32.start [1/16] %v438, 128
    %441 = vxpose.xlu0.b32.cont [2/16] 0.0, 128
    %442 = vxpose.xlu0.b32.cont [3/16] 0.0, 128
    %443 = vxpose.xlu0.b32.cont [4/16] 0.0, 128
    %444 = vxpose.xlu0.b32.cont [5/16] 0.0, 128
    %445 = vxpose.xlu0.b32.cont [6/16] 0.0, 128
    %446 = vxpose.xlu0.b32.cont [7/16] 0.0, 128
    %447 = vxpose.xlu0.b32.cont [8/16] 0.0, 128
    %448 = vxpose.xlu0.b32.cont [9/16] 0.0, 128
    %449 = vxpose.xlu0.b32.cont [10/16] 0.0, 128
    %450 = vxpose.xlu0.b32.cont [11/16] 0.0, 128
    %451 = vxpose.xlu0.b32.cont [12/16] 0.0, 128
    %452 = vxpose.xlu0.b32.cont [13/16] 0.0, 128
    %453 = vxpose.xlu0.b32.cont [14/16] 0.0, 128
    %454 = vxpose.xlu0.b32.cont [15/16] 0.0, 128
    %455 = vxpose.xlu0.b32.end [16/16] 0.0, 128
    %v456 = vpop.trf.xlu0
    %v457 = vpop.trf.xlu0
    %v458 = vpop.trf.xlu0
    %v459 = vpop.trf.xlu0
    %v460 = vpop.trf.xlu0
    %v461 = vpop.trf.xlu0
    %v462 = vpop.trf.xlu0
    %v463 = vpop.trf.xlu0
    %v464 = vpop.trf.xlu0
    %v465 = vpop.trf.xlu0
    %v466 = vpop.trf.xlu0
    %v467 = vpop.trf.xlu0
    %v468 = vpop.trf.xlu0
    %v469 = vpop.trf.xlu0
    %v470 = vpop.trf.xlu0
    %v471 = vpop.trf.xlu0
    %v472 = vrot.slane %v432, 1
    %v473 = vsel %vm437, %v433, %v472
    %475 = vxpose.xlu0.b32.start [1/16] %v473, 128
    %476 = vxpose.xlu0.b32.cont [2/16] 0.0, 128
    %477 = vxpose.xlu0.b32.cont [3/16] 0.0, 128
    %478 = vxpose.xlu0.b32.cont [4/16] 0.0, 128
    %479 = vxpose.xlu0.b32.cont [5/16] 0.0, 128
    %480 = vxpose.xlu0.b32.cont [6/16] 0.0, 128
    %481 = vxpose.xlu0.b32.cont [7/16] 0.0, 128
    %482 = vxpose.xlu0.b32.cont [8/16] 0.0, 128
    %483 = vxpose.xlu0.b32.cont [9/16] 0.0, 128
    %484 = vxpose.xlu0.b32.cont [10/16] 0.0, 128
    %485 = vxpose.xlu0.b32.cont [11/16] 0.0, 128
    %486 = vxpose.xlu0.b32.cont [12/16] 0.0, 128
    %487 = vxpose.xlu0.b32.cont [13/16] 0.0, 128
    %488 = vxpose.xlu0.b32.cont [14/16] 0.0, 128
    %489 = vxpose.xlu0.b32.cont [15/16] 0.0, 128
    %490 = vxpose.xlu0.b32.end [16/16] 0.0, 128
    %v491 = vpop.trf.xlu0
    %v492 = vpop.trf.xlu0
    %v493 = vpop.trf.xlu0
    %v494 = vpop.trf.xlu0
    %v495 = vpop.trf.xlu0
    %v496 = vpop.trf.xlu0
    %v497 = vpop.trf.xlu0
    %v498 = vpop.trf.xlu0
    %v499 = vpop.trf.xlu0
    %v500 = vpop.trf.xlu0
    %v501 = vpop.trf.xlu0
    %v502 = vpop.trf.xlu0
    %v503 = vpop.trf.xlu0
    %v504 = vpop.trf.xlu0
    %v505 = vpop.trf.xlu0
    %v506 = vpop.trf.xlu0
    %v507 = vmul.f32 %v428, %v456
    %v508 = vmul.f32 %v429, %v457
    %v509 = vmul.f32 %v430, %v458
    %v510 = vmul.f32 %v431, %v459
    %v511 = vmul.f32 %v374, %v507
    %v512 = vmul.f32 %v379, %v508
    %v513 = vmul.f32 %v384, %v509
    %v514 = vmul.f32 %v389, %v510
    %v515 = vsub.f32 %v491, %v511
    %v516 = vsub.f32 %v492, %v512
    %v517 = vsub.f32 %v493, %v513
    %v518 = vsub.f32 %v494, %v514
    %v519 = vld [vmem:[%s5] sm:$0x3]
    %vm520 = vcmask 15360
    %v522 = vsel %vm520, %v507, 0
    %v525 = vsel %vm520, %v508, 0
    %v528 = vsel %vm520, %v509, 0
    %v531 = vsel %vm520, %v510, 0
    %v534 = vsel %vm520, %v515, 0
    %v537 = vsel %vm520, %v516, 0
    %v540 = vsel %vm520, %v517, 0
    %v543 = vsel %vm520, %v518, 0
    %vm545 = vcmask 1041408
    %v547 = vsel %vm545, %v519, 0
    %549 = vmatprep.subr.mxu0 0.0
    %550 = vmatpush1.msra.mxu0 %v547
    %551 = vmatprep.subr.mxu0 0.0
    %552 = vmatpush1.msra.mxu0 0.0
    %553 = vmatprep.subr.mxu0 0.0
    %554 = vmatpush1.msra.mxu0 0.0
    %555 = vmatprep.subr.mxu0 0.0
    %556 = vmatpush1.msra.mxu0 0.0
    %557 = vmatprep.subr.mxu0 0.0
    %558 = vmatpush1.msra.mxu0 0.0
    %559 = vmatprep.subr.mxu0 0.0
    %560 = vmatpush1.msra.mxu0 0.0
    %561 = vmatprep.subr.mxu0 0.0
    %562 = vmatpush1.msra.mxu0 0.0
    %563 = vmatprep.subr.mxu0 0.0
    %564 = vmatpush1.msra.mxu0 0.0
    %565 = vmatprep.subr.mxu0 0.0
    %566 = vmatpush1.msra.mxu0 0.0
    %567 = vmatprep.subr.mxu0 0.0
    %568 = vmatpush1.msra.mxu0 0.0
    %569 = vmatprep.subr.mxu0 0.0
    %570 = vmatpush1.msra.mxu0 0.0
    %571 = vmatprep.subr.mxu0 0.0
    %572 = vmatpush1.msra.mxu0 0.0
    %573 = vmatprep.subr.mxu0 0.0
    %574 = vmatpush1.msra.mxu0 0.0
    %575 = vmatprep.subr.mxu0 0.0
    %576 = vmatpush1.msra.mxu0 0.0
    %577 = vmatprep.subr.mxu0 0.0
    %578 = vmatpush1.msra.mxu0 0.0
    %579 = vmatprep.subr.mxu0 0.0
    %580 = vmatpush1.msra.mxu0 0.0
    %581 = vmatprep.subr.mxu0 0.0
    %582 = vmatpush1.msra.mxu0 0.0
    %583 = vmatprep.subr.mxu0 0.0
    %584 = vmatpush1.msra.mxu0 0.0
    %585 = vmatprep.subr.mxu0 0.0
    %586 = vmatpush1.msra.mxu0 0.0
    %587 = vmatprep.subr.mxu0 0.0
    %588 = vmatpush1.msra.mxu0 0.0
    %589 = vmatprep.subr.mxu0 0.0
    %590 = vmatpush1.msra.mxu0 0.0
    %591 = vmatprep.subr.mxu0 0.0
    %592 = vmatpush1.msra.mxu0 0.0
    %593 = vmatprep.subr.mxu0 0.0
    %594 = vmatpush1.msra.mxu0 0.0
    %595 = vmatprep.subr.mxu0 0.0
    %596 = vmatpush1.msra.mxu0 0.0
    %597 = vmatprep.subr.mxu0 0.0
    %598 = vmatpush1.msra.mxu0 0.0
    %599 = vmatprep.subr.mxu0 0.0
    %600 = vmatpush1.msra.mxu0 0.0
    %601 = vmatprep.subr.mxu0 0.0
    %602 = vmatpush1.msra.mxu0 0.0
    %603 = vmatprep.subr.mxu0 0.0
    %604 = vmatpush1.msra.mxu0 0.0
    %605 = vmatprep.subr.mxu0 0.0
    %606 = vmatpush1.msra.mxu0 0.0
    %607 = vmatprep.subr.mxu0 0.0
    %608 = vmatpush1.msra.mxu0 0.0
    %609 = vmatprep.subr.mxu0 0.0
    %610 = vmatpush1.msra.mxu0 0.0
    %611 = vmatprep.subr.mxu0 0.0
    %612 = vmatpush1.msra.mxu0 0.0
    %613 = vmatprep.mubr.f32.mxu0 0.0
    %614 = vmatmul.mubr.f32.gmra.mrb[0].mxu0 %v522
    %v615 = vpop.f32.mrb[0].mxu0
    %v616 = vadd.f32 0.0, %v615
    %v617 = vpop.f32.mrb[0].mxu0
    %618 = vmatprep.mubr.f32.mxu0 0.0
    %619 = vmatmul.mubr.f32.gmra.mrb[0].mxu0 %v525
    %v620 = vpop.f32.mrb[0].mxu0
    %v621 = vadd.f32 0.0, %v620
    %v622 = vpop.f32.mrb[0].mxu0
    %623 = vmatprep.mubr.f32.mxu0 0.0
    %624 = vmatmul.mubr.f32.gmra.mrb[0].mxu0 %v528
    %v625 = vpop.f32.mrb[0].mxu0
    %v626 = vadd.f32 0.0, %v625
    %v627 = vpop.f32.mrb[0].mxu0
    %628 = vmatprep.mubr.f32.mxu0 0.0
    %629 = vmatmul.mubr.f32.gmra.mrb[0].mxu0 %v531
    %v630 = vpop.f32.mrb[0].mxu0
    %v631 = vadd.f32 0.0, %v630
    %v632 = vpop.f32.mrb[0].mxu0
    %633 = vmatprep.mubr.f32.mxu0 0.0
    %634 = vmatmul.mubr.f32.gmra.mrb[0].mxu0 %v534
    %v635 = vpop.f32.mrb[0].mxu0
    %v636 = vadd.f32 0.0, %v635
    %v637 = vpop.f32.mrb[0].mxu0
    %638 = vmatprep.mubr.f32.mxu0 0.0
    %639 = vmatmul.mubr.f32.gmra.mrb[0].mxu0 %v537
    %v640 = vpop.f32.mrb[0].mxu0
    %v641 = vadd.f32 0.0, %v640
    %v642 = vpop.f32.mrb[0].mxu0
    %643 = vmatprep.mubr.f32.mxu0 0.0
    %644 = vmatmul.mubr.f32.gmra.mrb[0].mxu0 %v540
    %v645 = vpop.f32.mrb[0].mxu0
    %v646 = vadd.f32 0.0, %v645
    %v647 = vpop.f32.mrb[0].mxu0
    %648 = vmatprep.mubr.f32.mxu0 0.0
    %649 = vmatmul.mubr.f32.gmra.mrb[0].mxu0 %v543
    %v650 = vpop.f32.mrb[0].mxu0
    %v651 = vadd.f32 0.0, %v650
    %v652 = vpop.f32.mrb[0].mxu0
    %653 = vdwg.mxu0
    %v654 = vmul.f32 %v118, %v616
    %v655 = vmul.f32 %v123, %v621
    %v656 = vmul.f32 %v128, %v626
    %v657 = vmul.f32 %v133, %v631
    %v658 = vadd.f32 %v654, %v636
    %v659 = vadd.f32 %v655, %v641
    %v660 = vadd.f32 %v656, %v646
    %v661 = vadd.f32 %v657, %v651
    %s662 = sld [smem:[#allocation2]]
    %v663 = vmax.f32 %v658, 0.0
    %v664 = vmax.f32 %v659, 0.0
    %v665 = vmax.f32 %v660, 0.0
    %v666 = vmax.f32 %v661, 0.0
    %v667 = vmin.f32 %v658, 0.0
    %v668 = vmin.f32 %v659, 0.0
    %v669 = vmin.f32 %v660, 0.0
    %v670 = vmin.f32 %v661, 0.0
    %v671 = vstv %s662
    %v672 = vmul.f32 %v671, %v667
    %v673 = vmul.f32 %v671, %v668
    %v674 = vmul.f32 %v671, %v669
    %v675 = vmul.f32 %v671, %v670
    %v676 = vadd.f32 %v663, %v672
    %v677 = vadd.f32 %v664, %v673
    %v678 = vadd.f32 %v665, %v674
    %v679 = vadd.f32 %v666, %v675
    %680 = vst.msk [vmem:[#allocation3] sm:$0xff] %vm144, %v676
    %681 = vst.msk [vmem:[#allocation3 + $0x8] sm:$0xff] %vm144, %v677
    %682 = vst.msk [vmem:[#allocation3 + $0x10] sm:$0xff] %vm144, %v678
    %683 = vst.msk [vmem:[#allocation3 + $0x18] sm:$0xff] %vm144, %v679
    // Predicated region
    $region30: #{tpu_custom_call.1} parent=1 // pred_check
      _
    $region31: #{tpu_custom_call.1} parent=1 // pred_check_branch
      %685 = sbr.rel (0) target = $region33
    $region32: #{tpu_custom_call.1} parent=1 // pred_region
      %s687 = ssub.s32 512, 512
      %688 = vsyncadd [#allocation4], %s687
      %s689 = sshll.u32 [#allocation3], 4
      %s690 = int_to_ptr.vmem [resolvable:$true] %s689
      %695 = dma.vmem_to_hbm [thread:$0]  %s690, 512, %s7, [#allocation4], 128, 128, 8
    $region33: #{tpu_custom_call.1} parent=1 // pred_fallthru
      _
    // Predicated region
    $region34: #{tpu_custom_call.1} parent=1 // pred_check
      _
    $region35: #{tpu_custom_call.1} parent=1 // pred_check_branch
      %697 = sbr.rel (0) target = $region37
    $region36: #{tpu_custom_call.1} parent=1 // pred_region
      %698 = dma.done [#allocation4], 512
    $region37: #{tpu_custom_call.1} parent=1 // pred_fallthru
      _
    %699 = vsyncpa [#allocation4], 1

</llo_original>
